<compile_context>
chip_gen: v6e
topology: v6e:2x2x1
jax: 0.10.0
libtpu: 0.0.40
codegen_flags: <defaults>
</compile_context>

<pallas_src>
import numpy as np
import jax
import jax.numpy as jnp
from jax.experimental import pallas as pl
from jax.experimental.pallas import tpu as pltpu


# ----------------------------------------------------------------------------
# Parameter setup (deterministic, mirrors the PyTorch __init__)
# ----------------------------------------------------------------------------
def build_position_encoding_table(d_model: int, max_seq_len: int) -> jnp.ndarray:
    pos = np.arange(max_seq_len, dtype=np.float64)[:, None]           # [L, 1]
    j = np.arange(d_model, dtype=np.float64)[None, :]                 # [1, D]
    angle = pos / np.power(10000.0, 2.0 * (j // 2) / d_model)         # [L, D]
    table = np.empty((max_seq_len, d_model), dtype=np.float64)
    table[:, 0::2] = np.sin(angle[:, 0::2])
    table[:, 1::2] = np.cos(angle[:, 1::2])
    pad_row = np.zeros((1, d_model), dtype=np.float64)
    table = np.concatenate([pad_row, table], axis=0)                  # [L+1, D]
    return jnp.asarray(table, dtype=jnp.float32)


# ----------------------------------------------------------------------------
# Pallas kernel: one full-width, lane-dense broadcast store per grid step.
# ----------------------------------------------------------------------------
def _pe_broadcast_kernel(row_ref, out_ref):
    # row_ref: (1, S*D) grid-constant row (DMA'd once).
    # out_ref: (bt, S*D) lane-dense output block.
    out_ref[...] = jnp.broadcast_to(row_ref[...], out_ref.shape)


# ----------------------------------------------------------------------------
# Tiling plan: batch tile from a VMEM byte budget, not an arbitrary cap.
# ----------------------------------------------------------------------------
def _plan_batch_tiling(batch_len: int, sd: int, itemsize: int):
    """Returns (batch_tile, padded_batch, grid_steps)."""
    # Small batches: a single full-extent block (block dim == full array dim is
    # always legal, even when not a multiple of 8). No padding, no slicing.
    if batch_len < 16:
        return batch_len, batch_len, 1

    # ~8 MiB output block; x2 for double buffering = 16 MiB, comfortably inside
    # v7x's 64 MiB physical VMEM and well under v5e/v6e's 128 MiB.
    TARGET_BLOCK_BYTES = 8 << 20
    bt = min(batch_len, max(8, TARGET_BLOCK_BYTES // (sd * itemsize)))
    bt = max(8, (bt // 8) * 8)                      # multiple of 8 sublanes

    # Guarantee >= 2 grid steps so both v7x TensorCores participate
    # (harmless extra pipelining on single-TC v5e/v6e).
    half = max(8, ((batch_len // 2) // 8) * 8)
    bt = min(bt, half)

    padded_batch = ((batch_len + bt - 1) // bt) * bt
    return bt, padded_batch, padded_batch // bt


# ----------------------------------------------------------------------------
# Forward wrapper
# ----------------------------------------------------------------------------
def positional_encoding_forward(batch_len: int, seq_len: int,
                                table: jnp.ndarray,
                                *, flat_output: bool = False) -> jnp.ndarray:
    """Returns Embedding([[1,2,...,2]]*batch) -> [batch, seq_len, d_model]."""
    vocab, d_model = table.shape
    if seq_len < 1:
        raise ValueError("seq_len must be >= 1")
    if vocab < (2 if seq_len == 1 else 3):
        raise ValueError("embedding table too small: need max_seq_len >= 2")

    dtype = table.dtype
    itemsize = jnp.dtype(dtype).itemsize
    sd = seq_len * d_model

    # Precompute the single unique output row once (plain JAX, outside kernel):
    # Embedding row 1 == PE(pos 0); row 2 == PE(pos 1) repeated seq_len-1 times.
    if seq_len == 1:
        row = table[1:2, :]
    else:
        row = jnp.concatenate(
            [table[1:2, :], jnp.tile(table[2:3, :], (1, seq_len - 1))], axis=1)
    row = row.reshape(1, sd)

    bt, padded_batch, grid_steps = _plan_batch_tiling(batch_len, sd, itemsize)

    block_bytes = bt * sd * itemsize
    row_bytes = sd * itemsize
    # 2x output double-buffer + 2x row buffer + slack; clamp into a range that
    # is valid on every generation (>= v5e's 16 MiB default, < v7x physical).
    vmem_limit = int(max(16 << 20,
                         min(2 * block_bytes + 2 * row_bytes + (1 << 20),
                             48 << 20)))

    cost = pl.CostEstimate(
        flops=0,
        transcendentals=0,
        bytes_accessed=int(padded_batch * sd * itemsize + row_bytes))

    out_flat = pl.pallas_call(
        _pe_broadcast_kernel,
        out_shape=jax.ShapeDtypeStruct((padded_batch, sd), dtype),
        grid=(grid_steps,),
        in_specs=[
            # Grid-constant (1, S*D) row; block == full array dims -> legal,
            # DMA'd once and kept resident.
            pl.BlockSpec((1, sd), lambda i: (0, 0)),
        ],
        out_specs=pl.BlockSpec((bt, sd), lambda i: (i, 0)),
        compiler_params=pltpu.CompilerParams(
            dimension_semantics=("parallel",),
            vmem_limit_bytes=vmem_limit),
        cost_estimate=cost,
    )(row)

    if padded_batch != batch_len:
        out_flat = out_flat[:batch_len]

    if flat_output:
        # Lane-dense (B, S*D); preferred when the consumer can take it as-is.
        return out_flat

    # Module-spec return shape [batch, time, dim].
    # TODO(synk): with small d_model (e.g. 32) this reshape may force a padded
    # relayout copy in XLA; ideally fuse the downstream `embeddings + pe` add
    # into this kernel (input_output_aliases) so the batch broadcast is never
    # materialized in HBM at all.
    return out_flat.reshape(batch_len, seq_len, d_model)


if __name__ == "__main__":
    d_model = 32
    max_seq_len = 8

    # forward() takes only scalar sizes; key kept for determinism-by-convention.
    _ = jax.random.PRNGKey(0)

    table = build_position_encoding_table(d_model, max_seq_len)   # [9, 32]

    # Small configs: tiny batch (single block), two-step parallel grid (16),
    # three-step grid (24), ragged seq_len (sd not a multiple of 128).
    for batch_len, seq_len in ((2, 8), (16, 8), (24, 8), (4, 5)):
        out = positional_encoding_forward(batch_len, seq_len, table)
        out = jax.block_until_ready(out)

        # Pure-JAX reference: the original embedding gather.
        row_idx = jnp.concatenate([jnp.array([1], dtype=jnp.int32),
                                   jnp.full((seq_len - 1,), 2, dtype=jnp.int32)])
        idx = jnp.broadcast_to(row_idx[None, :], (batch_len, seq_len))
        ref = jnp.take(table, idx, axis=0)                          # [B, S, D]

        assert out.shape == (batch_len, seq_len, d_model), out.shape
        assert out.dtype == table.dtype
        np.testing.assert_allclose(np.asarray(out), np.asarray(ref),
                                   rtol=1e-6, atol=1e-6)

    print("KERNEL_OK")
</pallas_src>

<mosaic_0001>
module attributes {stable_mosaic.version = 11 : i64} {
  func.func @_pe_broadcast_kernel(%arg0: i32, %arg1: memref<1x256xf32, #tpu.memory_space<vmem>>, %arg2: memref<2x256xf32, #tpu.memory_space<vmem>>) attributes {dimension_semantics = [#tpu.dimension_semantics<parallel>], iteration_bounds = array<i64: 1>, scalar_prefetch = 0 : i64, scratch_operands = 0 : i64, tpu.core_type = #tpu.core_type<tc>, window_params = [{pipeline_mode = #tpu.pipeline_mode<synchronous>, transform_indices = @transform_0, window_bounds = array<i64: 1, 256>}, {transform_indices = @transform_1, window_bounds = array<i64: 2, 256>}]} {
    %c0 = arith.constant 0 : index
    %c0_0 = arith.constant 0 : index
    %0 = vector.load %arg1[%c0, %c0_0] : memref<1x256xf32, #tpu.memory_space<vmem>>, vector<1x256xf32>
    %1 = vector.shape_cast %0 : vector<1x256xf32> to vector<1x256xf32>
    %2 = vector.broadcast %1 : vector<1x256xf32> to vector<2x256xf32>
    %c0_1 = arith.constant 0 : index
    %c0_2 = arith.constant 0 : index
    %3 = vector.load %arg2[%c0_1, %c0_2] : memref<2x256xf32, #tpu.memory_space<vmem>>, vector<2x256xf32>
    tpu.vector_store %arg2[%c0_1, %c0_2], %2 {strides = array<i32>} : memref<2x256xf32, #tpu.memory_space<vmem>>, vector<2x256xf32>,
    return
  }
  func.func @transform_0(%arg0: i32) -> (i32, i32) {
    %c0_i32 = arith.constant 0 : i32
    %c0_i32_0 = arith.constant 0 : i32
    %c0_i32_1 = arith.constant 0 : i32
    return %c0_i32, %c0_i32_0 : i32, i32
  }
  func.func @transform_1(%arg0: i32) -> (i32, i32) {
    %c0_i32 = arith.constant 0 : i32
    %c0_i32_0 = arith.constant 0 : i32
    return %arg0, %c0_i32 : i32, i32
  }
}

</mosaic_0001>

<llo_original>
// kernel: tpu_custom_call.1
$region0: #{tpu_custom_call.1}
  #allocation0 [shape = 'u32[]', space=smem, size = 0x4, offset = 0x4, fixed_abs, tag = 'smem constant byte address 0x4 - core index']
  #allocation1 [shape = 'u32[144,128]{1,0:T(1,128)}', space=vmem, size = 0x12000, scoped, tag = 'internal scratch']
  %s0 = inlined_call_operand.hbm [shape: f32[1,256], index: 0, kind: input, shape index: {}]
  %s1 = inlined_call_operand.hbm [shape: f32[2,256], index: 1, kind: output, shape index: {}]
  %s2 = sld [smem:[#allocation0]]
  $region18: #{tpu_custom_call.1} parent=0
    _
  %s4 = ssub.s32 1, %s2
  %s5 = scalar_select 0, %s4, %s2
  $region1: #{tpu_custom_call.1} parent=0
    #allocation2 [shape = 'u8[1024]{0}', space=vmem, size = 0x400, scoped, tag = 'input window, operand 0, single buffered']
    #allocation3 [shape = 's32[1]{0}', space=sflag, size = 0x4, scoped, tag = 'scoped memory for tpu_custom_call.1']
    #allocation4 [shape = 's32[1]{0}', space=sflag, size = 0x4, scoped, tag = 'scoped memory for tpu_custom_call.1']
    #allocation5 [shape = 'u8[2048]{0}', space=vmem, size = 0x800, scoped, tag = 'output window, operand 0, single buffered']
    %6 = vsyncpa [#allocation3], 0
    %7 = vsyncpa [#allocation4], 0
    // Predicated region
    $region2: #{tpu_custom_call.1} parent=1 // pred_check
      _
    $region3: #{tpu_custom_call.1} parent=1 // pred_check_branch
      %9 = sbr.rel (0) target = $region5
    $region4: #{tpu_custom_call.1} parent=1 // pred_region
      %s11 = ssub.s32 32, 32
      %12 = vsyncadd [#allocation3], %s11
      %s14 = sshll.u32 [#allocation2], 4
      %s15 = int_to_ptr.vmem [resolvable:$true] %s14
      %17 = dma.hbm_to_vmem [thread:$0]  %s0, 32, %s15, [#allocation3]
    $region5: #{tpu_custom_call.1} parent=1 // pred_fallthru
      _
    // Predicated region
    $region6: #{tpu_custom_call.1} parent=1 // pred_check
      _
    $region7: #{tpu_custom_call.1} parent=1 // pred_check_branch
      %19 = sbr.rel (0) target = $region9
    $region8: #{tpu_custom_call.1} parent=1 // pred_region
      %20 = dma.done [#allocation3], 32
    $region9: #{tpu_custom_call.1} parent=1 // pred_fallthru
      _
    %v21 = vld [vmem:[#allocation2] sm:$0x3]
    %v23 = vlaneseq
    %v24 = vshrl.u32 %v23, 7
    %v25 = vsub.s32 0, %v24
    %v26 = vrot.slane %v21, %v25
    %v27 = vlaneseq
    %v28 = vshrl.u32 %v27, 7
    %v29 = vsub.s32 1, %v28
    %v30 = vrot.slane %v21, %v29
    %v31 = vcombine.low %v26, %v30
    %v33 = vunpack.c.l.s4 1983009808
    %v34 = vunpack.c.0.s8 %v33
    %v35 = vlaneseq
    %v36 = vshrl.u32 %v35, 7
    %v37 = vsub.s32 %v34, %v36
    %v38 = vrot.slane %v31, %v37
    %40 = vst [vmem:[#allocation5] sm:$0xf] %v38
    // Predicated region
    $region10: #{tpu_custom_call.1} parent=1 // pred_check
      _
    $region11: #{tpu_custom_call.1} parent=1 // pred_check_branch
      %42 = sbr.rel (0) target = $region13
    $region12: #{tpu_custom_call.1} parent=1 // pred_region
      %s44 = ssub.s32 64, 64
      %45 = vsyncadd [#allocation4], %s44
      %s47 = sshll.u32 [#allocation5], 4
      %s48 = int_to_ptr.vmem [resolvable:$true] %s47
      %50 = dma.vmem_to_hbm [thread:$0]  %s48, 64, %s1, [#allocation4]
    $region13: #{tpu_custom_call.1} parent=1 // pred_fallthru
      _
    // Predicated region
    $region14: #{tpu_custom_call.1} parent=1 // pred_check
      _
    $region15: #{tpu_custom_call.1} parent=1 // pred_check_branch
      %52 = sbr.rel (0) target = $region17
    $region16: #{tpu_custom_call.1} parent=1 // pred_region
      %53 = dma.done [#allocation4], 64
    $region17: #{tpu_custom_call.1} parent=1 // pred_fallthru
      _
    %54 = vsyncpa [#allocation3], 1
    %55 = vsyncpa [#allocation4], 1

</llo_original>
